<compile_context>
chip_gen: v7x
topology: tpu7x:2x2x1
jax: 0.10.0
libtpu: 0.0.40
codegen_flags: <defaults>
</compile_context>

<pallas_src>
import functools

import jax
import jax.numpy as jnp
from jax import lax
from jax.experimental import pallas as pl
from jax.experimental.pallas import tpu as pltpu


def _round_up(x, m):
    return ((x + m - 1) // m) * m


def _vmem_limit_bytes():
    # Generation-aware VMEM budget (v5e/v6e: 128 MiB physical, v7x: 64 MiB).
    try:
        cap = int(pltpu.get_tpu_info().vmem_capacity_bytes)
    except Exception:
        cap = 64 * 1024 * 1024
    return min(cap * 3 // 4, 100 * 1024 * 1024)


def _pick_time_tiling(T):
    # Pad T up to a multiple of 8 and pick the largest time-block that divides it.
    Tp = _round_up(max(T, 1), 8)
    for ts in (32, 16, 8):
        if Tp % ts == 0:
            return Tp, ts
    return Tp, 8


# --------------------------------------------------------------------------------------
# Kernel 0: batched input projection, both directions fused along the gate axis
# --------------------------------------------------------------------------------------
def _input_proj_kernel(x_ref, w_ref, b_ref, gi_ref):
    x = x_ref[...].astype(jnp.bfloat16)                       # bf16 MXU operands
    acc = jnp.dot(x, w_ref[...], preferred_element_type=jnp.float32) + b_ref[...]
    gi_ref[...] = acc.astype(gi_ref.dtype)


def input_projection(x, wih6_t, bih6):
    # x: (Np, D) f32, wih6_t: (D, 6*Hp) bf16, bih6: (1, 6*Hp) f32  ->  (Np, 6*Hp) bf16
    Np, D = x.shape
    G6 = wih6_t.shape[-1]
    TN = Np if Np <= 512 else 512
    cost = pl.CostEstimate(
        flops=2 * Np * D * G6,
        transcendentals=0,
        bytes_accessed=4 * Np * D + 2 * D * G6 + 4 * G6 + 2 * Np * G6,
    )
    return pl.pallas_call(
        _input_proj_kernel,
        grid=(pl.cdiv(Np, TN),),
        in_specs=[
            pl.BlockSpec((TN, D), lambda r: (r, 0)),
            pl.BlockSpec((D, G6), lambda r: (0, 0)),
            pl.BlockSpec((1, G6), lambda r: (0, 0)),
        ],
        out_specs=pl.BlockSpec((TN, G6), lambda r: (r, 0)),
        out_shape=jax.ShapeDtypeStruct((Np, G6), jnp.bfloat16),
        compiler_params=pltpu.CompilerParams(
            dimension_semantics=("parallel",),
            vmem_limit_bytes=_vmem_limit_bytes(),
        ),
        cost_estimate=cost,
    )(x, wih6_t, bih6)


# --------------------------------------------------------------------------------------
# Kernel 1: bidirectional GRU recurrence (input projection already done)
# --------------------------------------------------------------------------------------
def _bigru_kernel(gi_ref, h0_ref, whh_ref, bhhn_ref, out_ref, h_scr, *,
                  Bp, Hp, TS, Tb, T_real, mask_tail):
    d = pl.program_id(0)     # 0 = forward, 1 = backward
    i = pl.program_id(1)     # time-block index (backward blocks arrive reversed)

    @pl.when(i == 0)
    def _():
        h_scr[...] = h0_ref[...]

    # Hoisted out of the time loop: whh stays resident across the whole block.
    # NOTE: explicit weight-stationary MXU driving (pltpu.matmul_push_rhs /
    # matmul_acc_lhs / matmul_pop) would avoid re-pushing whh every timestep;
    # jnp.dot is kept for portable lowering across v5e/v6e/v7x.
    whh = whh_ref[...]                                       # (Hp, 3Hp) bf16
    bhh_n = jnp.broadcast_to(bhhn_ref[...], (Bp, Hp))        # (Bp, Hp) f32, hoisted

    def make_step(reverse, t_base):
        def step(s, h):
            s_loc = (TS - 1 - s) if reverse else s
            gi = gi_ref[s_loc]                               # (Bp, 3Hp) bf16, precomputed
            gh = jnp.dot(h.astype(jnp.bfloat16), whh,
                         preferred_element_type=jnp.float32)  # (Bp, 3Hp) f32
            # Gate math stays f32 (v5e has no bf16 VPU/EUP).
            r = jax.nn.sigmoid(gi[:, 0 * Hp:1 * Hp] + gh[:, 0 * Hp:1 * Hp])
            z = jax.nn.sigmoid(gi[:, 1 * Hp:2 * Hp] + gh[:, 1 * Hp:2 * Hp])
            n = jnp.tanh(gi[:, 2 * Hp:3 * Hp] + r * (gh[:, 2 * Hp:3 * Hp] + bhh_n))
            h_new = (1.0 - z) * n + z * h
            if mask_tail:                    # python-static: only when T was padded
                h_new = jnp.where(t_base + s_loc < T_real, h_new, h)
            out_ref[s_loc] = h_new.astype(out_ref.dtype)
            return h_new
        return step

    # Branch on direction so the in-loop time index is not a function of d,
    # and use a partial unroll: the chain is serially dependent, full unroll
    # only adds vreg pressure / spills.
    @pl.when(d == 0)
    def _fwd():
        h_scr[...] = lax.fori_loop(0, TS, make_step(False, i * TS),
                                   h_scr[...], unroll=4)

    @pl.when(d == 1)
    def _bwd():
        h_scr[...] = lax.fori_loop(0, TS, make_step(True, (Tb - 1 - i) * TS),
                                   h_scr[...], unroll=4)


def bigru_recurrence(gi, h0p, whh_t, bhh_n, *, T_real, TS):
    # gi: (Tp, Bp, 6Hp) bf16, h0p: (2, Bp, Hp) f32,
    # whh_t: (2, Hp, 3Hp) bf16, bhh_n: (2, 1, Hp) f32   ->   (2, Tp, Bp, Hp) bf16
    Tp, Bp, G6 = gi.shape
    Hp = h0p.shape[-1]
    Tb = Tp // TS
    mask_tail = (Tp != T_real)

    kernel = functools.partial(_bigru_kernel, Bp=Bp, Hp=Hp, TS=TS, Tb=Tb,
                               T_real=T_real, mask_tail=mask_tail)
    cost = pl.CostEstimate(
        flops=2 * Tp * (2 * Bp * Hp * 3 * Hp + 14 * Bp * Hp),
        transcendentals=2 * Tp * 3 * Bp * Hp,
        bytes_accessed=(2 * Tp * Bp * G6 + 2 * 2 * Tp * Bp * Hp
                        + 2 * 2 * Hp * 3 * Hp + 4 * 2 * Bp * Hp),
    )

    return pl.pallas_call(
        kernel,
        grid=(2, Tb),
        in_specs=[
            pl.BlockSpec((TS, Bp, 3 * Hp),
                         lambda d, i: (i + d * (Tb - 1 - 2 * i), 0, d)),
            pl.BlockSpec((None, Bp, Hp), lambda d, i: (d, 0, 0)),
            pl.BlockSpec((None, Hp, 3 * Hp), lambda d, i: (d, 0, 0)),
            pl.BlockSpec((None, 1, Hp), lambda d, i: (d, 0, 0)),
        ],
        out_specs=pl.BlockSpec((None, TS, Bp, Hp),
                               lambda d, i: (d, i + d * (Tb - 1 - 2 * i), 0, 0)),
        out_shape=jax.ShapeDtypeStruct((2, Tp, Bp, Hp), jnp.bfloat16),
        scratch_shapes=[pltpu.VMEM((Bp, Hp), jnp.float32)],
        compiler_params=pltpu.CompilerParams(
            # On v7x, pltpu.CORE_PARALLEL on the direction axis would pin
            # fwd/bwd onto the two TensorCores; "parallel" is kept here so the
            # same kernel also compiles on single-TC v5e/v6e.
            dimension_semantics=("parallel", "arbitrary"),
            vmem_limit_bytes=_vmem_limit_bytes(),
        ),
        cost_estimate=cost,
    )(gi, h0p, whh_t, bhh_n)


# --------------------------------------------------------------------------------------
# Kernel 2: Linear + Softmax, vocab-tiled weights, fwd/bwd halves read separately
# --------------------------------------------------------------------------------------
def _linear_softmax_kernel(y_ref, w_ref, b_ref, o_ref, *, TV, nV):
    v = pl.program_id(1)
    logits = (jnp.dot(y_ref[0], w_ref[0], preferred_element_type=jnp.float32)
              + jnp.dot(y_ref[1], w_ref[1], preferred_element_type=jnp.float32)
              + b_ref[...])
    if nV == 1:
        o_ref[...] = logits
    else:
        start = pl.multiple_of(v * TV, TV)
        o_ref[:, pl.ds(start, TV)] = logits

    @pl.when(v == nV - 1)
    def _():
        full = o_ref[...]
        m = jnp.max(full, axis=-1, keepdims=True)
        e = jnp.exp(full - m)
        s = jnp.sum(e, axis=-1, keepdims=True)
        # exact reciprocal so rows sum to 1 (parity with torch softmax)
        o_ref[...] = e * pl.reciprocal(s, approx=False)


def _pick_vocab_tile(V):
    if V <= 2048:
        return V
    for c in (2048, 1024, 512, 256, 128):
        if V % c == 0:
            return c
    return V


def linear_softmax(y, w_lin_t, b_lin):
    # y: (2, Np, Hp) bf16, w_lin_t: (2, Hp, V) bf16, b_lin: (1, V) f32 -> (Np, V) f32
    _, Np, Hp = y.shape
    V = w_lin_t.shape[-1]
    TV = _pick_vocab_tile(V)
    nV = V // TV
    # bound the VMEM-resident (TN, V) f32 output/logits block to ~8 MiB
    budget_rows = max(16, (8 * 1024 * 1024 // (4 * V)) // 16 * 16)
    TN = min(Np, 512, budget_rows)
    nR = pl.cdiv(Np, TN)

    kernel = functools.partial(_linear_softmax_kernel, TV=TV, nV=nV)
    cost = pl.CostEstimate(
        flops=2 * 2 * Np * Hp * V + 5 * Np * V,
        transcendentals=Np * V,
        bytes_accessed=2 * 2 * Np * Hp + 2 * 2 * Hp * V + 4 * V + 4 * Np * V,
    )
    return pl.pallas_call(
        kernel,
        grid=(nR, nV),
        in_specs=[
            pl.BlockSpec((2, TN, Hp), lambda r, v: (0, r, 0)),
            pl.BlockSpec((2, Hp, TV), lambda r, v: (0, 0, v)),
            pl.BlockSpec((1, TV), lambda r, v: (0, v)),
        ],
        out_specs=pl.BlockSpec((TN, V), lambda r, v: (r, 0)),
        out_shape=jax.ShapeDtypeStruct((Np, V), jnp.float32),
        compiler_params=pltpu.CompilerParams(
            dimension_semantics=("parallel", "arbitrary"),
            vmem_limit_bytes=_vmem_limit_bytes(),
        ),
        cost_estimate=cost,
    )(y, w_lin_t, b_lin)


# --------------------------------------------------------------------------------------
# Full module forward
# --------------------------------------------------------------------------------------
def gru_module_forward(feature, h0, params):
    T, B, D = feature.shape
    H = h0.shape[-1]
    Hp = params["Hp"]
    V = params["b_lin"].shape[-1]
    Bp = _round_up(B, 8)
    Tp, TS = _pick_time_tiling(T)

    x = feature
    if (Tp, Bp) != (T, B):
        x = jnp.pad(x, ((0, Tp - T), (0, Bp - B), (0, 0)))
    h0p = h0
    if (Bp, Hp) != (B, H):
        h0p = jnp.pad(h0, ((0, 0), (0, Bp - B), (0, Hp - H)))

    # 1) input projections: both directions, all timesteps, one bf16 matmul
    gi = input_projection(x.reshape(Tp * Bp, D), params["wih6_t"], params["bih6"])
    gi = gi.reshape(Tp, Bp, 6 * Hp)                         # contiguous, free

    # 2) sequential bidirectional recurrence
    hs = bigru_recurrence(gi, h0p, params["whh_t"], params["bhh_n"],
                          T_real=T, TS=TS)                  # (2, Tp, Bp, Hp) bf16

    h_next = jnp.stack([hs[0, T - 1, :B, :H], hs[1, 0, :B, :H]],
                       axis=0).astype(jnp.float32)          # (2, B, H)

    # 3) fused linear + softmax (W_lin split per direction -> no (T,B,2H) concat)
    probs = linear_softmax(hs.reshape(2, Tp * Bp, Hp),
                           params["w_lin_t"], params["b_lin"])
    output = probs.reshape(Tp, Bp, V)[:T, :B, :]            # (T, B, V)
    return output, h_next


# --------------------------------------------------------------------------------------
# Parameter init (shapes follow nn.GRU / nn.Linear); pre-padded + pre-transposed
# --------------------------------------------------------------------------------------
def init_params(key, D, H, V):
    ks = jax.random.split(key, 10)
    s = 1.0 / jnp.sqrt(jnp.float32(H))
    u = lambda k, shape: jax.random.uniform(k, shape, jnp.float32, -s, s)

    wih_f = u(ks[0], (3 * H, D)); whh_f = u(ks[1], (3 * H, H))
    bih_f = u(ks[2], (3 * H,));   bhh_f = u(ks[3], (3 * H,))
    wih_b = u(ks[4], (3 * H, D)); whh_b = u(ks[5], (3 * H, H))
    bih_b = u(ks[6], (3 * H,));   bhh_b = u(ks[7], (3 * H,))
    w_lin = u(ks[8], (V, 2 * H)); b_lin = u(ks[9], (V,))

    Hp = _round_up(H, 128)   # lane-dense hidden dimension

    def pad_gate_rows(w):            # (3H, K) -> (3Hp, K), zero-padded per gate
        w3 = w.reshape(3, H, -1)
        return jnp.pad(w3, ((0, 0), (0, Hp - H), (0, 0))).reshape(3 * Hp, -1)

    def pad_gate_vec(b):             # (3H,) -> (3Hp,)
        b3 = b.reshape(3, H)
        return jnp.pad(b3, ((0, 0), (0, Hp - H))).reshape(3 * Hp)

    def prep_dir(wih, whh, bih, bhh):
        wih_t = pad_gate_rows(wih).T                            # (D, 3Hp)
        whh_p = pad_gate_rows(whh)                              # (3Hp, H)
        whh_t = jnp.pad(whh_p, ((0, 0), (0, Hp - H))).T         # (Hp, 3Hp)
        # fold b_hh for the r/z gates into the precomputed input bias
        fold = bih.reshape(3, H) + bhh.reshape(3, H) * jnp.array([[1.0], [1.0], [0.0]])
        bih3 = pad_gate_vec(fold.reshape(3 * H))                # (3Hp,)
        bhh_n = jnp.pad(bhh.reshape(3, H)[2], (0, Hp - H))      # (Hp,)
        return wih_t, whh_t, bih3, bhh_n

    wih_tf, whh_tf, bih3f, bhhnf = prep_dir(wih_f, whh_f, bih_f, bhh_f)
    wih_tb, whh_tb, bih3b, bhhnb = prep_dir(wih_b, whh_b, bih_b, bhh_b)

    w_lin_f = jnp.pad(w_lin[:, :H], ((0, 0), (0, Hp - H))).T    # (Hp, V)
    w_lin_b = jnp.pad(w_lin[:, H:], ((0, 0), (0, Hp - H))).T    # (Hp, V)

    return {
        "Hp": Hp,
        # both directions fused along the gate axis, bf16 MXU operands
        "wih6_t": jnp.concatenate([wih_tf, wih_tb], axis=1).astype(jnp.bfloat16),  # (D, 6Hp)
        "bih6": jnp.concatenate([bih3f, bih3b]).reshape(1, -1),                    # (1, 6Hp) f32
        "whh_t": jnp.stack([whh_tf, whh_tb], axis=0).astype(jnp.bfloat16),         # (2, Hp, 3Hp)
        "bhh_n": jnp.stack([bhhnf, bhhnb], axis=0).reshape(2, 1, Hp),              # (2, 1, Hp) f32
        "w_lin_t": jnp.stack([w_lin_f, w_lin_b], axis=0).astype(jnp.bfloat16),     # (2, Hp, V)
        "b_lin": b_lin.reshape(1, -1),                                             # (1, V) f32
        # raw f32 copies for the pure-JAX reference
        "_raw": (wih_f, whh_f, bih_f, bhh_f, wih_b, whh_b, bih_b, bhh_b, w_lin, b_lin),
    }


# --------------------------------------------------------------------------------------
# Pure-JAX reference (f32) for verification
# --------------------------------------------------------------------------------------
def reference_forward(feature, h0, params):
    wih_f, whh_f, bih_f, bhh_f, wih_b, whh_b, bih_b, bhh_b, w_lin, b_lin = params["_raw"]
    H = h0.shape[-1]

    def cell(x, h, wih, whh, bih, bhh):
        gi = x @ wih.T + bih
        gh = h @ whh.T + bhh
        r = jax.nn.sigmoid(gi[:, :H] + gh[:, :H])
        z = jax.nn.sigmoid(gi[:, H:2 * H] + gh[:, H:2 * H])
        n = jnp.tanh(gi[:, 2 * H:] + r * gh[:, 2 * H:])
        return (1.0 - z) * n + z * h

    def scan_dir(xs, h_init, wih, whh, bih, bhh):
        def step(h, x):
            h_new = cell(x, h, wih, whh, bih, bhh)
            return h_new, h_new
        return jax.lax.scan(step, h_init, xs)

    hT_f, ys_f = scan_dir(feature, h0[0], wih_f, whh_f, bih_f, bhh_f)
    hT_b, ys_b_rev = scan_dir(feature[::-1], h0[1], wih_b, whh_b, bih_b, bhh_b)
    ys_b = ys_b_rev[::-1]
    out = jnp.concatenate([ys_f, ys_b], axis=-1)
    h_next = jnp.stack([hT_f, hT_b], axis=0)

    logits = out @ w_lin.T + b_lin
    probs = jax.nn.softmax(logits, axis=-1)
    return probs, h_next


# --------------------------------------------------------------------------------------
if __name__ == "__main__":
    def check(T, B, D, H, V):
        key = jax.random.PRNGKey(0)
        k_feat, k_h, k_par = jax.random.split(key, 3)
        feature = jax.random.normal(k_feat, (T, B, D), jnp.float32)
        h0 = jax.random.normal(k_h, (2, B, H), jnp.float32)
        params = init_params(k_par, D, H, V)

        out, h_next = gru_module_forward(feature, h0, params)
        out = jax.block_until_ready(out)
        h_next = jax.block_until_ready(h_next)

        ref_out, ref_h = reference_forward(feature, h0, params)
        assert out.shape == (T, B, V) and h_next.shape == (2, B, H)
        # bf16 MXU operands + bf16 HBM intermediates -> compare at ~1e-2 level vs f32 ref
        assert jnp.allclose(out, ref_out, atol=5e-2, rtol=5e-2), (
            "out mismatch: %s" % jnp.max(jnp.abs(out - ref_out)))
        assert jnp.allclose(h_next, ref_h, atol=5e-2, rtol=5e-2), (
            "h_next mismatch: %s" % jnp.max(jnp.abs(h_next - ref_h)))

    check(T=8, B=2, D=16, H=32, V=16)   # batch/hidden padding paths
    check(T=5, B=3, D=16, H=32, V=16)   # time-tail masking path (T padded to 8)

    print("KERNEL_OK")
</pallas_src>

<mosaic_0001>
module attributes {stable_mosaic.version = 11 : i64} {
  func.func @_input_proj_kernel(%arg0: i32, %arg1: memref<64x16xf32, #tpu.memory_space<vmem>>, %arg2: memref<16x768xbf16, #tpu.memory_space<vmem>>, %arg3: memref<1x768xf32, #tpu.memory_space<vmem>>, %arg4: memref<64x768xbf16, #tpu.memory_space<vmem>>) attributes {dimension_semantics = [#tpu.dimension_semantics<parallel>], iteration_bounds = array<i64: 1>, scalar_prefetch = 0 : i64, scratch_operands = 0 : i64, tpu.core_type = #tpu.core_type<tc>, window_params = [{transform_indices = @transform_0, window_bounds = array<i64: 64, 16>}, {pipeline_mode = #tpu.pipeline_mode<synchronous>, transform_indices = @transform_1, window_bounds = array<i64: 16, 768>}, {pipeline_mode = #tpu.pipeline_mode<synchronous>, transform_indices = @transform_2, window_bounds = array<i64: 1, 768>}, {transform_indices = @transform_3, window_bounds = array<i64: 64, 768>}]} {
    %c0 = arith.constant 0 : index
    %c0_0 = arith.constant 0 : index
    %0 = vector.load %arg1[%c0, %c0_0] : memref<64x16xf32, #tpu.memory_space<vmem>>, vector<64x16xf32>
    %1 = arith.truncf %0 : vector<64x16xf32> to vector<64x16xbf16>
    %c0_1 = arith.constant 0 : index
    %c0_2 = arith.constant 0 : index
    %2 = vector.load %arg2[%c0_1, %c0_2] : memref<16x768xbf16, #tpu.memory_space<vmem>>, vector<16x768xbf16>
    %cst = arith.constant dense<0.000000e+00> : vector<64x768xf32>
    %3 = tpu.matmul %1, %2, %cst {dimension_numbers = #tpu.dot_dimension_numbers<[1], [0], [0], [1], [0, 0, 1, 1], [], []>} : vector<64x16xbf16>, vector<16x768xbf16>, vector<64x768xf32> -> vector<64x768xf32>
    %c0_3 = arith.constant 0 : index
    %c0_4 = arith.constant 0 : index
    %4 = vector.load %arg3[%c0_3, %c0_4] : memref<1x768xf32, #tpu.memory_space<vmem>>, vector<1x768xf32>
    %5 = vector.broadcast %4 : vector<1x768xf32> to vector<64x768xf32>
    %6 = arith.addf %3, %5 : vector<64x768xf32>
    %7 = arith.truncf %6 : vector<64x768xf32> to vector<64x768xbf16>
    %c0_5 = arith.constant 0 : index
    %c0_6 = arith.constant 0 : index
    %8 = vector.load %arg4[%c0_5, %c0_6] : memref<64x768xbf16, #tpu.memory_space<vmem>>, vector<64x768xbf16>
    tpu.vector_store %arg4[%c0_5, %c0_6], %7 {strides = array<i32>} : memref<64x768xbf16, #tpu.memory_space<vmem>>, vector<64x768xbf16>,
    return
  }
  func.func @transform_0(%arg0: i32) -> (i32, i32) {
    %c0_i32 = arith.constant 0 : i32
    %c0_i32_0 = arith.constant 0 : i32
    return %arg0, %c0_i32 : i32, i32
  }
  func.func @transform_1(%arg0: i32) -> (i32, i32) {
    %c0_i32 = arith.constant 0 : i32
    %c0_i32_0 = arith.constant 0 : i32
    %c0_i32_1 = arith.constant 0 : i32
    return %c0_i32, %c0_i32_0 : i32, i32
  }
  func.func @transform_2(%arg0: i32) -> (i32, i32) {
    %c0_i32 = arith.constant 0 : i32
    %c0_i32_0 = arith.constant 0 : i32
    %c0_i32_1 = arith.constant 0 : i32
    return %c0_i32, %c0_i32_0 : i32, i32
  }
  func.func @transform_3(%arg0: i32) -> (i32, i32) {
    %c0_i32 = arith.constant 0 : i32
    %c0_i32_0 = arith.constant 0 : i32
    return %arg0, %c0_i32 : i32, i32
  }
}

</mosaic_0001>

<llo_original>
// kernel: tpu_custom_call.1
$region0: #{tpu_custom_call.1}
  #allocation0 [shape = 'u32[]', space=smem, size = 0x4, offset = 0x4, fixed_abs, tag = 'smem constant byte address 0x4 - core index']
  #allocation1 [shape = 'u32[144,128]{1,0:T(1,128)}', space=vmem, size = 0x12000, scoped, tag = 'internal scratch']
  %s0 = inlined_call_operand.vmem [shape: f32[64,16], index: 0, kind: input, shape index: {}]
  %s1 = inlined_call_operand.vmem [shape: bf16[16,768], index: 1, kind: input, shape index: {}]
  %s2 = inlined_call_operand.vmem [shape: f32[1,768], index: 2, kind: input, shape index: {}]
  %s3 = inlined_call_operand.hbm [shape: bf16[64,768], index: 3, kind: output, shape index: {}]
  %s4 = sld [smem:[#allocation0]]
  $region22: #{tpu_custom_call.1} parent=0
    _
  %s6 = ssub.s32 1, %s4
  %s7 = scalar_select 0, %s6, %s4
  $region1: #{tpu_custom_call.1} parent=0
    #allocation2 [shape = 'u8[98304]{0}', space=vmem, size = 0x18000, scoped, tag = 'output window, operand 0, single buffered']
    #allocation3 [shape = 's32[1]{0}', space=sflag, size = 0x4, scoped, tag = 'scoped memory for tpu_custom_call.1']
    %8 = vsyncpa [#allocation3], 0
    // Predicated region
    $region2: #{tpu_custom_call.1} parent=1 // pred_check
      _
    $region3: #{tpu_custom_call.1} parent=1 // pred_check_branch
      %10 = sbr.rel (0) target = $region5
    $region4: #{tpu_custom_call.1} parent=1 // pred_region
      _
    $region5: #{tpu_custom_call.1} parent=1 // pred_fallthru
      _
    // Predicated region
    $region6: #{tpu_custom_call.1} parent=1 // pred_check
      _
    $region7: #{tpu_custom_call.1} parent=1 // pred_check_branch
      %12 = sbr.rel (0) target = $region9
    $region8: #{tpu_custom_call.1} parent=1 // pred_region
      _
    $region9: #{tpu_custom_call.1} parent=1 // pred_fallthru
      _
    // Predicated region
    $region10: #{tpu_custom_call.1} parent=1 // pred_check
      _
    $region11: #{tpu_custom_call.1} parent=1 // pred_check_branch
      %14 = sbr.rel (0) target = $region13
    $region12: #{tpu_custom_call.1} parent=1 // pred_region
      _
    $region13: #{tpu_custom_call.1} parent=1 // pred_fallthru
      _
    %v16 = vld [vmem:[%s0] sm:$0xff]
    %v17 = vld [vmem:[%s0 + $0x8] sm:$0xff]
    %v18 = vld [vmem:[%s0 + $0x10] sm:$0xff]
    %v19 = vld [vmem:[%s0 + $0x18] sm:$0xff]
    %v20 = vld [vmem:[%s0 + $0x20] sm:$0xff]
    %v21 = vld [vmem:[%s0 + $0x28] sm:$0xff]
    %v22 = vld [vmem:[%s0 + $0x30] sm:$0xff]
    %v23 = vld [vmem:[%s0 + $0x38] sm:$0xff]
    %v24 = vpack.c.bf16 %v17, %v16
    %v25 = vpack.c.bf16 %v19, %v18
    %v26 = vpack.c.bf16 %v21, %v20
    %v27 = vpack.c.bf16 %v23, %v22
    %v28 = vld [vmem:[%s1] sm:$0xff]
    %v29 = vld [vmem:[%s1 + $0x8] sm:$0xff]
    %v30 = vld [vmem:[%s1 + $0x10] sm:$0xff]
    %v31 = vld [vmem:[%s1 + $0x18] sm:$0xff]
    %v32 = vld [vmem:[%s1 + $0x20] sm:$0xff]
    %v33 = vld [vmem:[%s1 + $0x28] sm:$0xff]
    %v34 = vld [vmem:[%s2] sm:$0x3f]
    %v36 = vlaneseq
    %v37 = vshrl.u32 %v36, 7
    %v38 = vsub.s32 0, %v37
    %v39 = vrot.slane %v34, %v38
    %v40 = vlaneseq
    %v41 = vshrl.u32 %v40, 7
    %v42 = vsub.s32 1, %v41
    %v43 = vrot.slane %v34, %v42
    %v44 = vlaneseq
    %v45 = vshrl.u32 %v44, 7
    %v46 = vsub.s32 2, %v45
    %v47 = vrot.slane %v34, %v46
    %v48 = vlaneseq
    %v49 = vshrl.u32 %v48, 7
    %v50 = vsub.s32 3, %v49
    %v51 = vrot.slane %v34, %v50
    %v52 = vlaneseq
    %v53 = vshrl.u32 %v52, 7
    %v54 = vsub.s32 4, %v53
    %v55 = vrot.slane %v34, %v54
    %v56 = vlaneseq
    %v57 = vshrl.u32 %v56, 7
    %v58 = vsub.s32 5, %v57
    %v59 = vrot.slane %v34, %v58
    %v72 = vunpack.c.l.b16 %v28
    %v73 = vunpack.c.h.b16 %v28
    %v74 = vunpack.c.l.b16 %v29
    %v75 = vunpack.c.h.b16 %v29
    %v76 = vunpack.c.l.b16 %v30
    %v77 = vunpack.c.h.b16 %v30
    %v78 = vunpack.c.l.b16 %v31
    %v79 = vunpack.c.h.b16 %v31
    %v80 = vunpack.c.l.b16 %v32
    %v81 = vunpack.c.h.b16 %v32
    %v82 = vunpack.c.l.b16 %v33
    %v83 = vunpack.c.h.b16 %v33
    %v84 = vpack.c.b16 %v78, %v72
    %v85 = vpack.c.b16 %v79, %v73
    %v86 = vpack.c.b16 %v80, %v74
    %v87 = vpack.c.b16 %v81, %v75
    %v88 = vpack.c.b16 %v82, %v76
    %v89 = vpack.c.b16 %v83, %v77
    %vm96 = vcmask 130048
    %v98 = vsel %vm96, %v24, 0
    %v101 = vsel %vm96, %v25, 0
    %v104 = vsel %vm96, %v26, 0
    %v107 = vsel %vm96, %v27, 0
    %109 = vmatprep.subr.bf16.mxu0 %v85
    %110 = vmatpush1.bf16.msra.mxu0 %v84
    %111 = vmatprep.subr.bf16.mxu0 0
    %112 = vmatpush1.bf16.msra.mxu0 0
    %113 = vmatprep.subr.bf16.mxu0 0
    %114 = vmatpush1.bf16.msra.mxu0 0
    %115 = vmatprep.subr.bf16.mxu0 0
    %116 = vmatpush1.bf16.msra.mxu0 0
    %117 = vmatprep.subr.bf16.mxu0 0
    %118 = vmatpush1.bf16.msra.mxu0 0
    %119 = vmatprep.subr.bf16.mxu0 0
    %120 = vmatpush1.bf16.msra.mxu0 0
    %121 = vmatprep.subr.bf16.mxu0 0
    %122 = vmatpush1.bf16.msra.mxu0 0
    %123 = vmatprep.subr.bf16.mxu0 0
    %124 = vmatpush1.bf16.msra.mxu0 0
    %125 = vmatprep.subr.bf16.mxu0 0
    %126 = vmatpush1.bf16.msra.mxu0 0
    %127 = vmatprep.subr.bf16.mxu0 0
    %128 = vmatpush1.bf16.msra.mxu0 0
    %129 = vmatprep.subr.bf16.mxu0 0
    %130 = vmatpush1.bf16.msra.mxu0 0
    %131 = vmatprep.subr.bf16.mxu0 0
    %132 = vmatpush1.bf16.msra.mxu0 0
    %133 = vmatprep.subr.bf16.mxu0 0
    %134 = vmatpush1.bf16.msra.mxu0 0
    %135 = vmatprep.subr.bf16.mxu0 0
    %136 = vmatpush1.bf16.msra.mxu0 0
    %137 = vmatprep.subr.bf16.mxu0 0
    %138 = vmatpush1.bf16.msra.mxu0 0
    %139 = vmatprep.subr.bf16.mxu0 0
    %140 = vmatpush1.bf16.msra.mxu0 0
    %141 = vmatprep.mubr.bf16.mxu0 0
    %142 = vmatmul.mubr.bf16.gmra.mrb[0].mxu0 %v98
    %v143 = vpop.f32.mrb[0].mxu0
    %v144 = vadd.f32 %v39, %v143
    %v145 = vpop.f32.mrb[0].mxu0
    %v146 = vadd.f32 %v43, %v145
    %v147 = vpop.f32.mrb[0].mxu0
    %v148 = vadd.f32 %v39, %v147
    %v149 = vpop.f32.mrb[0].mxu0
    %v150 = vadd.f32 %v43, %v149
    %151 = vmatprep.mubr.bf16.mxu0 0
    %152 = vmatmul.mubr.bf16.gmra.mrb[0].mxu0 %v101
    %v153 = vpop.f32.mrb[0].mxu0
    %v154 = vadd.f32 %v39, %v153
    %v155 = vpop.f32.mrb[0].mxu0
    %v156 = vadd.f32 %v43, %v155
    %v157 = vpop.f32.mrb[0].mxu0
    %v158 = vadd.f32 %v39, %v157
    %v159 = vpop.f32.mrb[0].mxu0
    %v160 = vadd.f32 %v43, %v159
    %161 = vmatprep.mubr.bf16.mxu0 0
    %162 = vmatmul.mubr.bf16.gmra.mrb[0].mxu0 %v104
    %v163 = vpop.f32.mrb[0].mxu0
    %v164 = vadd.f32 %v39, %v163
    %v165 = vpop.f32.mrb[0].mxu0
    %v166 = vadd.f32 %v43, %v165
    %v167 = vpop.f32.mrb[0].mxu0
    %v168 = vadd.f32 %v39, %v167
    %v169 = vpop.f32.mrb[0].mxu0
    %v170 = vadd.f32 %v43, %v169
    %171 = vmatprep.mubr.bf16.mxu0 0
    %172 = vmatmul.mubr.bf16.gmra.mrb[0].mxu0 %v107
    %v173 = vpop.f32.mrb[0].mxu0
    %v174 = vadd.f32 %v39, %v173
    %v175 = vpop.f32.mrb[0].mxu0
    %v176 = vadd.f32 %v43, %v175
    %v177 = vpop.f32.mrb[0].mxu0
    %v178 = vadd.f32 %v39, %v177
    %v179 = vpop.f32.mrb[0].mxu0
    %v180 = vadd.f32 %v43, %v179
    %181 = vdwg.mxu0
    %182 = vmatprep.subr.bf16.mxu0 %v87
    %183 = vmatpush1.bf16.msra.mxu0 %v86
    %184 = vmatprep.subr.bf16.mxu0 0
    %185 = vmatpush1.bf16.msra.mxu0 0
    %186 = vmatprep.subr.bf16.mxu0 0
    %187 = vmatpush1.bf16.msra.mxu0 0
    %188 = vmatprep.subr.bf16.mxu0 0
    %189 = vmatpush1.bf16.msra.mxu0 0
    %190 = vmatprep.subr.bf16.mxu0 0
    %191 = vmatpush1.bf16.msra.mxu0 0
    %192 = vmatprep.subr.bf16.mxu0 0
    %193 = vmatpush1.bf16.msra.mxu0 0
    %194 = vmatprep.subr.bf16.mxu0 0
    %195 = vmatpush1.bf16.msra.mxu0 0
    %196 = vmatprep.subr.bf16.mxu0 0
    %197 = vmatpush1.bf16.msra.mxu0 0
    %198 = vmatprep.subr.bf16.mxu0 0
    %199 = vmatpush1.bf16.msra.mxu0 0
    %200 = vmatprep.subr.bf16.mxu0 0
    %201 = vmatpush1.bf16.msra.mxu0 0
    %202 = vmatprep.subr.bf16.mxu0 0
    %203 = vmatpush1.bf16.msra.mxu0 0
    %204 = vmatprep.subr.bf16.mxu0 0
    %205 = vmatpush1.bf16.msra.mxu0 0
    %206 = vmatprep.subr.bf16.mxu0 0
    %207 = vmatpush1.bf16.msra.mxu0 0
    %208 = vmatprep.subr.bf16.mxu0 0
    %209 = vmatpush1.bf16.msra.mxu0 0
    %210 = vmatprep.subr.bf16.mxu0 0
    %211 = vmatpush1.bf16.msra.mxu0 0
    %212 = vmatprep.subr.bf16.mxu0 0
    %213 = vmatpush1.bf16.msra.mxu0 0
    %214 = vmatprep.mubr.bf16.mxu0 0
    %215 = vmatmul.mubr.bf16.gmra.mrb[0].mxu0 %v98
    %v216 = vpop.f32.mrb[0].mxu0
    %v217 = vadd.f32 %v47, %v216
    %v218 = vpop.f32.mrb[0].mxu0
    %v219 = vadd.f32 %v51, %v218
    %v220 = vpop.f32.mrb[0].mxu0
    %v221 = vadd.f32 %v47, %v220
    %v222 = vpop.f32.mrb[0].mxu0
    %v223 = vadd.f32 %v51, %v222
    %224 = vmatprep.mubr.bf16.mxu0 0
    %225 = vmatmul.mubr.bf16.gmra.mrb[0].mxu0 %v101
    %v226 = vpop.f32.mrb[0].mxu0
    %v227 = vadd.f32 %v47, %v226
    %v228 = vpop.f32.mrb[0].mxu0
    %v229 = vadd.f32 %v51, %v228
    %v230 = vpop.f32.mrb[0].mxu0
    %v231 = vadd.f32 %v47, %v230
    %v232 = vpop.f32.mrb[0].mxu0
    %v233 = vadd.f32 %v51, %v232
    %234 = vmatprep.mubr.bf16.mxu0 0
    %235 = vmatmul.mubr.bf16.gmra.mrb[0].mxu0 %v104
    %v236 = vpop.f32.mrb[0].mxu0
    %v237 = vadd.f32 %v47, %v236
    %v238 = vpop.f32.mrb[0].mxu0
    %v239 = vadd.f32 %v51, %v238
    %v240 = vpop.f32.mrb[0].mxu0
    %v241 = vadd.f32 %v47, %v240
    %v242 = vpop.f32.mrb[0].mxu0
    %v243 = vadd.f32 %v51, %v242
    %244 = vmatprep.mubr.bf16.mxu0 0
    %245 = vmatmul.mubr.bf16.gmra.mrb[0].mxu0 %v107
    %v246 = vpop.f32.mrb[0].mxu0
    %v247 = vadd.f32 %v47, %v246
    %v248 = vpop.f32.mrb[0].mxu0
    %v249 = vadd.f32 %v51, %v248
    %v250 = vpop.f32.mrb[0].mxu0
    %v251 = vadd.f32 %v47, %v250
    %v252 = vpop.f32.mrb[0].mxu0
    %v253 = vadd.f32 %v51, %v252
    %254 = vdwg.mxu0
    %255 = vmatprep.subr.bf16.mxu0 %v89
    %256 = vmatpush1.bf16.msra.mxu0 %v88
    %257 = vmatprep.subr.bf16.mxu0 0
    %258 = vmatpush1.bf16.msra.mxu0 0
    %259 = vmatprep.subr.bf16.mxu0 0
    %260 = vmatpush1.bf16.msra.mxu0 0
    %261 = vmatprep.subr.bf16.mxu0 0
    %262 = vmatpush1.bf16.msra.mxu0 0
    %263 = vmatprep.subr.bf16.mxu0 0
    %264 = vmatpush1.bf16.msra.mxu0 0
    %265 = vmatprep.subr.bf16.mxu0 0
    %266 = vmatpush1.bf16.msra.mxu0 0
    %267 = vmatprep.subr.bf16.mxu0 0
    %268 = vmatpush1.bf16.msra.mxu0 0
    %269 = vmatprep.subr.bf16.mxu0 0
    %270 = vmatpush1.bf16.msra.mxu0 0
    %271 = vmatprep.subr.bf16.mxu0 0
    %272 = vmatpush1.bf16.msra.mxu0 0
    %273 = vmatprep.subr.bf16.mxu0 0
    %274 = vmatpush1.bf16.msra.mxu0 0
    %275 = vmatprep.subr.bf16.mxu0 0
    %276 = vmatpush1.bf16.msra.mxu0 0
    %277 = vmatprep.subr.bf16.mxu0 0
    %278 = vmatpush1.bf16.msra.mxu0 0
    %279 = vmatprep.subr.bf16.mxu0 0
    %280 = vmatpush1.bf16.msra.mxu0 0
    %281 = vmatprep.subr.bf16.mxu0 0
    %282 = vmatpush1.bf16.msra.mxu0 0
    %283 = vmatprep.subr.bf16.mxu0 0
    %284 = vmatpush1.bf16.msra.mxu0 0
    %285 = vmatprep.subr.bf16.mxu0 0
    %286 = vmatpush1.bf16.msra.mxu0 0
    %287 = vmatprep.mubr.bf16.mxu0 0
    %288 = vmatmul.mubr.bf16.gmra.mrb[0].mxu0 %v98
    %v289 = vpop.f32.mrb[0].mxu0
    %v290 = vadd.f32 %v55, %v289
    %v291 = vpop.f32.mrb[0].mxu0
    %v292 = vadd.f32 %v59, %v291
    %v293 = vpop.f32.mrb[0].mxu0
    %v294 = vadd.f32 %v55, %v293
    %v295 = vpop.f32.mrb[0].mxu0
    %v296 = vadd.f32 %v59, %v295
    %297 = vmatprep.mubr.bf16.mxu0 0
    %298 = vmatmul.mubr.bf16.gmra.mrb[0].mxu0 %v101
    %v299 = vpop.f32.mrb[0].mxu0
    %v300 = vadd.f32 %v55, %v299
    %v301 = vpop.f32.mrb[0].mxu0
    %v302 = vadd.f32 %v59, %v301
    %v303 = vpop.f32.mrb[0].mxu0
    %v304 = vadd.f32 %v55, %v303
    %v305 = vpop.f32.mrb[0].mxu0
    %v306 = vadd.f32 %v59, %v305
    %307 = vmatprep.mubr.bf16.mxu0 0
    %308 = vmatmul.mubr.bf16.gmra.mrb[0].mxu0 %v104
    %v309 = vpop.f32.mrb[0].mxu0
    %v310 = vadd.f32 %v55, %v309
    %v311 = vpop.f32.mrb[0].mxu0
    %v312 = vadd.f32 %v59, %v311
    %v313 = vpop.f32.mrb[0].mxu0
    %v314 = vadd.f32 %v55, %v313
    %v315 = vpop.f32.mrb[0].mxu0
    %v316 = vadd.f32 %v59, %v315
    %317 = vmatprep.mubr.bf16.mxu0 0
    %318 = vmatmul.mubr.bf16.gmra.mrb[0].mxu0 %v107
    %v319 = vpop.f32.mrb[0].mxu0
    %v320 = vadd.f32 %v55, %v319
    %v321 = vpop.f32.mrb[0].mxu0
    %v322 = vadd.f32 %v59, %v321
    %v323 = vpop.f32.mrb[0].mxu0
    %v324 = vadd.f32 %v55, %v323
    %v325 = vpop.f32.mrb[0].mxu0
    %v326 = vadd.f32 %v59, %v325
    %327 = vdwg.mxu0
    %v328 = vpack.c.bf16 %v148, %v144
    %v329 = vpack.c.bf16 %v150, %v146
    %v330 = vpack.c.bf16 %v221, %v217
    %v331 = vpack.c.bf16 %v223, %v219
    %v332 = vpack.c.bf16 %v294, %v290
    %v333 = vpack.c.bf16 %v296, %v292
    %v334 = vpack.c.bf16 %v158, %v154
    %v335 = vpack.c.bf16 %v160, %v156
    %v336 = vpack.c.bf16 %v231, %v227
    %v337 = vpack.c.bf16 %v233, %v229
    %v338 = vpack.c.bf16 %v304, %v300
    %v339 = vpack.c.bf16 %v306, %v302
    %v340 = vpack.c.bf16 %v168, %v164
    %v341 = vpack.c.bf16 %v170, %v166
    %v342 = vpack.c.bf16 %v241, %v237
    %v343 = vpack.c.bf16 %v243, %v239
    %v344 = vpack.c.bf16 %v314, %v310
    %v345 = vpack.c.bf16 %v316, %v312
    %v346 = vpack.c.bf16 %v178, %v174
    %v347 = vpack.c.bf16 %v180, %v176
    %v348 = vpack.c.bf16 %v251, %v247
    %v349 = vpack.c.bf16 %v253, %v249
    %v350 = vpack.c.bf16 %v324, %v320
    %v351 = vpack.c.bf16 %v326, %v322
    %v376 = vunpack.c.l.b16 %v328
    %v377 = vunpack.c.l.b16 %v329
    %v378 = vunpack.c.l.b16 %v330
    %v379 = vunpack.c.l.b16 %v331
    %v380 = vunpack.c.l.b16 %v332
    %v381 = vunpack.c.l.b16 %v333
    %v382 = vunpack.c.h.b16 %v328
    %v383 = vunpack.c.h.b16 %v329
    %v384 = vunpack.c.h.b16 %v330
    %v385 = vunpack.c.h.b16 %v331
    %v386 = vunpack.c.h.b16 %v332
    %v387 = vunpack.c.h.b16 %v333
    %v388 = vunpack.c.l.b16 %v334
    %v389 = vunpack.c.l.b16 %v335
    %v390 = vunpack.c.l.b16 %v336
    %v391 = vunpack.c.l.b16 %v337
    %v392 = vunpack.c.l.b16 %v338
    %v393 = vunpack.c.l.b16 %v339
    %v394 = vunpack.c.h.b16 %v334
    %v395 = vunpack.c.h.b16 %v335
    %v396 = vunpack.c.h.b16 %v336
    %v397 = vunpack.c.h.b16 %v337
    %v398 = vunpack.c.h.b16 %v338
    %v399 = vunpack.c.h.b16 %v339
    %v400 = vunpack.c.l.b16 %v340
    %v401 = vunpack.c.l.b16 %v341
    %v402 = vunpack.c.l.b16 %v342
    %v403 = vunpack.c.l.b16 %v343
    %v404 = vunpack.c.l.b16 %v344
    %v405 = vunpack.c.l.b16 %v345
    %v406 = vunpack.c.h.b16 %v340
    %v407 = vunpack.c.h.b16 %v341
    %v408 = vunpack.c.h.b16 %v342
    %v409 = vunpack.c.h.b16 %v343
    %v410 = vunpack.c.h.b16 %v344
    %v411 = vunpack.c.h.b16 %v345
    %v412 = vunpack.c.l.b16 %v346
    %v413 = vunpack.c.l.b16 %v347
    %v414 = vunpack.c.l.b16 %v348
    %v415 = vunpack.c.l.b16 %v349
    %v416 = vunpack.c.l.b16 %v350
    %v417 = vunpack.c.l.b16 %v351
    %v418 = vunpack.c.h.b16 %v346
    %v419 = vunpack.c.h.b16 %v347
    %v420 = vunpack.c.h.b16 %v348
    %v421 = vunpack.c.h.b16 %v349
    %v422 = vunpack.c.h.b16 %v350
    %v423 = vunpack.c.h.b16 %v351
    %v424 = vpack.c.b16 %v377, %v376
    %v425 = vpack.c.b16 %v379, %v378
    %v426 = vpack.c.b16 %v381, %v380
    %v427 = vpack.c.b16 %v383, %v382
    %v428 = vpack.c.b16 %v385, %v384
    %v429 = vpack.c.b16 %v387, %v386
    %v430 = vpack.c.b16 %v389, %v388
    %v431 = vpack.c.b16 %v391, %v390
    %v432 = vpack.c.b16 %v393, %v392
    %v433 = vpack.c.b16 %v395, %v394
    %v434 = vpack.c.b16 %v397, %v396
    %v435 = vpack.c.b16 %v399, %v398
    %v436 = vpack.c.b16 %v401, %v400
    %v437 = vpack.c.b16 %v403, %v402
    %v438 = vpack.c.b16 %v405, %v404
    %v439 = vpack.c.b16 %v407, %v406
    %v440 = vpack.c.b16 %v409, %v408
    %v441 = vpack.c.b16 %v411, %v410
    %v442 = vpack.c.b16 %v413, %v412
    %v443 = vpack.c.b16 %v415, %v414
    %v444 = vpack.c.b16 %v417, %v416
    %v445 = vpack.c.b16 %v419, %v418
    %v446 = vpack.c.b16 %v421, %v420
    %v447 = vpack.c.b16 %v423, %v422
    %472 = vst [vmem:[#allocation2] sm:$0xff] %v424
    %473 = vst [vmem:[#allocation2 + $0x8] sm:$0xff] %v425
    %474 = vst [vmem:[#allocation2 + $0x10] sm:$0xff] %v426
    %475 = vst [vmem:[#allocation2 + $0x18] sm:$0xff] %v427
    %476 = vst [vmem:[#allocation2 + $0x20] sm:$0xff] %v428
    %477 = vst [vmem:[#allocation2 + $0x28] sm:$0xff] %v429
    %478 = vst [vmem:[#allocation2 + $0x30] sm:$0xff] %v430
    %479 = vst [vmem:[#allocation2 + $0x38] sm:$0xff] %v431
    %480 = vst [vmem:[#allocation2 + $0x40] sm:$0xff] %v432
    %481 = vst [vmem:[#allocation2 + $0x48] sm:$0xff] %v433
    %482 = vst [vmem:[#allocation2 + $0x50] sm:$0xff] %v434
    %483 = vst [vmem:[#allocation2 + $0x58] sm:$0xff] %v435
    %484 = vst [vmem:[#allocation2 + $0x60] sm:$0xff] %v436
    %485 = vst [vmem:[#allocation2 + $0x68] sm:$0xff] %v437
    %486 = vst [vmem:[#allocation2 + $0x70] sm:$0xff] %v438
    %487 = vst [vmem:[#allocation2 + $0x78] sm:$0xff] %v439
    %488 = vst [vmem:[#allocation2 + $0x80] sm:$0xff] %v440
    %489 = vst [vmem:[#allocation2 + $0x88] sm:$0xff] %v441
    %490 = vst [vmem:[#allocation2 + $0x90] sm:$0xff] %v442
    %491 = vst [vmem:[#allocation2 + $0x98] sm:$0xff] %v443
    %492 = vst [vmem:[#allocation2 + $0xa0] sm:$0xff] %v444
    %493 = vst [vmem:[#allocation2 + $0xa8] sm:$0xff] %v445
    %494 = vst [vmem:[#allocation2 + $0xb0] sm:$0xff] %v446
    %495 = vst [vmem:[#allocation2 + $0xb8] sm:$0xff] %v447
    // Predicated region
    $region14: #{tpu_custom_call.1} parent=1 // pred_check
      _
    $region15: #{tpu_custom_call.1} parent=1 // pred_check_branch
      %497 = sbr.rel (0) target = $region17
    $region16: #{tpu_custom_call.1} parent=1 // pred_region
      %s499 = ssub.s32 3072, 3072
      %500 = vsyncadd [#allocation3], %s499
      %s501 = sshll.u32 [#allocation2], 4
      %s502 = int_to_ptr.vmem [resolvable:$true] %s501
      %507 = dma.vmem_to_hbm [thread:$0]  %s502, 3072, %s3, [#allocation3], 384, 384, 24
    $region17: #{tpu_custom_call.1} parent=1 // pred_fallthru
      _
    // Predicated region
    $region18: #{tpu_custom_call.1} parent=1 // pred_check
      _
    $region19: #{tpu_custom_call.1} parent=1 // pred_check_branch
      %509 = sbr.rel (0) target = $region21
    $region20: #{tpu_custom_call.1} parent=1 // pred_region
      %510 = dma.done [#allocation3], 3072
    $region21: #{tpu_custom_call.1} parent=1 // pred_fallthru
      _
    %511 = vsyncpa [#allocation3], 1

</llo_original>
